<compile_context>
chip_gen: v7x
topology: tpu7x:2x2x1
jax: 0.10.0
libtpu: 0.0.40
codegen_flags: <defaults>
</compile_context>

<pallas_src>
import math

import jax
import jax.numpy as jnp
from jax import lax
from jax.experimental import pallas as pl
from jax.experimental.pallas import tpu as pltpu

_MIB = 1024 * 1024


def _round_up(v, m):
    return (v + m - 1) // m * m


def _sublane_pack(dtype):
    # Packed min-tile rows: 8 for 4-byte, 16 for 2-byte, 32 for 1-byte dtypes.
    return 8 * max(1, 4 // jnp.dtype(dtype).itemsize)


def _vmem_budget_bytes():
    # v5e/v6e: 128 MiB VMEM per TensorCore; v7x: 64 MiB.  Ask for at most half
    # the physical capacity (leaves headroom for compiler-internal scratch),
    # capped at 48 MiB.
    cap = 64 * _MIB  # safest fallback (v7x)
    try:
        info = pltpu.get_tpu_info()
        cap = int(getattr(info, "vmem_capacity_bytes", cap))
    except Exception:
        pass
    return min(cap // 2, 48 * _MIB)


def _pick_tile(dim, target, align):
    """Full dim if it fits the target, else an align-rounded target tile."""
    if dim <= target:
        return dim
    t = _round_up(min(target, dim), align)
    return t if t < dim else dim


# -----------------------------------------------------------------------------
# Kernels
# -----------------------------------------------------------------------------
def _linear_resident_kernel(x_ref, wt_ref, o_ref):
    """1-D grid over M; whole (K, O) weight resident in VMEM."""
    o_ref[...] = jnp.dot(
        x_ref[...], wt_ref[...], preferred_element_type=jnp.float32
    ).astype(o_ref.dtype)


def _linear_tiled_kernel(x_ref, wt_ref, o_ref, acc_ref):
    """3-D (M, O, K) grid; K innermost with an f32 accumulator scratch."""
    k = pl.program_id(2)
    part = jnp.dot(x_ref[...], wt_ref[...], preferred_element_type=jnp.float32)

    @pl.when(k == 0)
    def _assign():
        acc_ref[...] = part

    @pl.when(k != 0)
    def _accumulate():
        acc_ref[...] += part

    @pl.when(k == pl.num_programs(2) - 1)
    def _store():
        o_ref[...] = acc_ref[...].astype(o_ref.dtype)


# -----------------------------------------------------------------------------
# Wrapper
# -----------------------------------------------------------------------------
def _linear_2d(x2d, wt, out_dtype, *, tm_target=256, tn_target=256,
               tk_target=512, max_resident_bytes=None):
    """x2d: (M, K); wt: (K, O) pre-transposed weight; returns (M, O)."""
    m, k = x2d.shape
    k_w, o = wt.shape
    assert k == k_w, "in_features mismatch"

    cdt = x2d.dtype
    item = jnp.dtype(cdt).itemsize
    out_item = jnp.dtype(out_dtype).itemsize
    pack = _sublane_pack(cdt)
    budget = _vmem_budget_bytes()

    # Row tile: pack-aligned; guarantee >=2 M tiles when M is large so the
    # "parallel" axis can be sharded across v7x's two TensorCores.
    if m >= 256 and _round_up(pl.cdiv(m, 2), pack) <= tm_target:
        tm = _round_up(pl.cdiv(m, 2), pack)
    else:
        tm = _pick_tile(m, tm_target, pack)

    # ------------------------------------------------------------------
    # Fast path: keep the whole transposed weight resident in VMEM.
    # ------------------------------------------------------------------
    resident_cap = budget if max_resident_bytes is None else max_resident_bytes
    resident_need = (2 * k * o * item          # weight (budget double-buffer)
                     + 2 * tm * k * item       # x tile, double-buffered
                     + 2 * tm * o * out_item)  # out tile, double-buffered
    if resident_need <= resident_cap:
        grid = (pl.cdiv(m, tm),)
        vmem_limit = int(min(budget, max(16 * _MIB, 2 * resident_need)))
        cost = pl.CostEstimate(
            flops=2 * m * k * o,
            transcendentals=0,
            bytes_accessed=(m * k + k * o) * item + m * o * out_item,
        )
        return pl.pallas_call(
            _linear_resident_kernel,
            out_shape=jax.ShapeDtypeStruct((m, o), out_dtype),
            grid_spec=pltpu.PrefetchScalarGridSpec(
                num_scalar_prefetch=0,
                grid=grid,
                in_specs=[
                    pl.BlockSpec((tm, k), lambda i: (i, 0)),
                    # Constant index map -> weight DMA'd once, kept resident.
                    pl.BlockSpec((k, o), lambda i: (0, 0)),
                ],
                out_specs=pl.BlockSpec((tm, o), lambda i: (i, 0)),
            ),
            compiler_params=pltpu.CompilerParams(
                dimension_semantics=("parallel",),
                vmem_limit_bytes=vmem_limit,
            ),
            cost_estimate=cost,
        )(x2d, wt)

    # ------------------------------------------------------------------
    # General path: 3-D tiled grid with K-innermost f32 accumulation.
    # ------------------------------------------------------------------
    tn = _pick_tile(o, tn_target, 128)
    tk = _pick_tile(k, tk_target, 128)
    kp = _round_up(k, tk)
    if kp != k:
        # Zero-padding K is required for reduction correctness.  Ragged M/O
        # edge blocks are handled by masked stores, so nothing else is padded.
        x2d = jnp.pad(x2d, ((0, 0), (0, kp - k)))
        wt = jnp.pad(wt, ((0, kp - k), (0, 0)))

    n_i = pl.cdiv(m, tm)
    n_j = pl.cdiv(o, tn)
    grid = (n_i, n_j, kp // tk)

    need = (2 * (tm * tk + tk * tn) * item
            + 2 * tm * tn * out_item
            + tm * tn * 4)
    vmem_limit = int(min(budget, max(16 * _MIB, 2 * need)))
    cost = pl.CostEstimate(
        flops=2 * m * kp * o,
        transcendentals=0,
        # x is re-read once per O tile, wt once per M tile.
        bytes_accessed=(m * kp * item * n_j + kp * o * item * n_i
                        + m * o * out_item),
    )
    return pl.pallas_call(
        _linear_tiled_kernel,
        out_shape=jax.ShapeDtypeStruct((m, o), out_dtype),
        grid_spec=pltpu.PrefetchScalarGridSpec(
            num_scalar_prefetch=0,
            grid=grid,
            in_specs=[
                pl.BlockSpec((tm, tk), lambda i, j, kk: (i, kk)),
                pl.BlockSpec((tk, tn), lambda i, j, kk: (kk, j)),
            ],
            out_specs=pl.BlockSpec((tm, tn), lambda i, j, kk: (i, j)),
            scratch_shapes=[pltpu.VMEM((tm, tn), jnp.float32)],
        ),
        compiler_params=pltpu.CompilerParams(
            dimension_semantics=("parallel", "parallel", "arbitrary"),
            vmem_limit_bytes=vmem_limit,
        ),
        cost_estimate=cost,
    )(x2d, wt)


def steerer_forward(x, weights, *, compute_dtype=None, tm_target=256,
                    tn_target=256, tk_target=512, max_resident_bytes=None):
    """Functional equivalent of Steerer.forward: F.linear(x, weights)."""
    x = lax.stop_gradient(x)  # matches .clone().detach().requires_grad_(False)
    *lead, k_in = x.shape
    o_feat, k_w = weights.shape
    assert k_in == k_w, "in_features mismatch"

    out_dtype = x.dtype
    cdt = jnp.dtype(compute_dtype) if compute_dtype is not None else x.dtype

    m = math.prod(lead) if lead else 1
    x2d = x.reshape(m, k_in).astype(cdt)
    wt = weights.T.astype(cdt)  # (K, O); hoisted out of the hot path in Steerer
    out2d = _linear_2d(x2d, wt, out_dtype, tm_target=tm_target,
                       tn_target=tn_target, tk_target=tk_target,
                       max_resident_bytes=max_resident_bytes)
    return out2d.reshape(*lead, o_feat)


class Steerer:
    """Pallas TPU port of the PyTorch `Steerer` module.

    Weight transpose/cast is done once at construction (weights are
    parameters), so the jitted forward only touches x.
    """

    def __init__(self, weights, *, compute_dtype=None, tm_target=256,
                 tn_target=256, tk_target=512, max_resident_bytes=None):
        w = jnp.asarray(weights)
        self.out_features, self.in_features = w.shape
        cdt = jnp.dtype(compute_dtype) if compute_dtype is not None else w.dtype
        self._wt = jnp.asarray(w.T, dtype=cdt)  # (K, O), prepared once
        out_features = self.out_features

        def _fwd(x, wt):
            x = lax.stop_gradient(x)
            *lead, k_in = x.shape
            m = math.prod(lead) if lead else 1
            out2d = _linear_2d(
                x.reshape(m, k_in).astype(wt.dtype), wt, x.dtype,
                tm_target=tm_target, tn_target=tn_target,
                tk_target=tk_target, max_resident_bytes=max_resident_bytes)
            return out2d.reshape(*lead, out_features)

        # jit so the reshape/cast fuse around the pallas_call.
        self._fwd = jax.jit(_fwd)

    def __call__(self, x):
        return self._fwd(x, self._wt)


if __name__ == "__main__":
    key = jax.random.PRNGKey(0)
    kx, kw, kx2, kw2 = jax.random.split(key, 4)

    # Case 1: small steering-head shapes (batch=2, seq=8, hidden=32 -> 16),
    # resident-weight fast path, bit-faithful f32 vs F.linear.
    batch, seq, d_in, d_out = 2, 8, 32, 16
    x = jax.random.normal(kx, (batch, seq, d_in), dtype=jnp.float32)
    w = jax.random.normal(kw, (d_out, d_in), dtype=jnp.float32) * 0.1
    steerer = Steerer(w)
    out = jax.block_until_ready(steerer(x))
    ref = jnp.einsum("bsk,ok->bso", x, w)
    assert out.shape == (batch, seq, d_out)
    assert jnp.allclose(out, ref, atol=1e-4, rtol=1e-4), "case 1 mismatch"

    # Case 2: non-tile-multiple shapes -> multi-tile 1-D grid with a ragged
    # last M block (masked stores), still the resident-weight path.
    b2, s2, k2, o2 = 3, 70, 160, 192
    x2 = jax.random.normal(kx2, (b2, s2, k2), dtype=jnp.float32)
    w2 = jax.random.normal(kw2, (o2, k2), dtype=jnp.float32) * 0.05
    out2 = jax.block_until_ready(steerer_forward(x2, w2, tm_target=128))
    ref2 = jnp.einsum("bsk,ok->bso", x2, w2)
    assert out2.shape == (b2, s2, o2)
    assert jnp.allclose(out2, ref2, atol=1e-4, rtol=1e-4), "case 2 mismatch"

    # Case 3: force the general 3-D tiled path (K-innermost accumulator,
    # assign-on-first-k, zero-padded K) on the same small shapes.
    out3 = jax.block_until_ready(
        steerer_forward(x2, w2, tm_target=128, tn_target=128, tk_target=128,
                        max_resident_bytes=0))
    assert jnp.allclose(out3, ref2, atol=1e-4, rtol=1e-4), "case 3 mismatch"

    # Case 4: bf16 compute with f32 accumulation (fast-numerics option).
    out4 = jax.block_until_ready(
        steerer_forward(x2, w2, compute_dtype=jnp.bfloat16))
    assert jnp.allclose(out4, ref2, atol=1e-1, rtol=5e-2), "case 4 mismatch"

    print("KERNEL_OK")
</pallas_src>

<mosaic_0001>
module attributes {stable_mosaic.version = 11 : i64} {
  func.func @_linear_resident_kernel(%arg0: i32, %arg1: memref<16x32xf32, #tpu.memory_space<vmem>>, %arg2: memref<32x16xf32, #tpu.memory_space<vmem>>, %arg3: memref<16x16xf32, #tpu.memory_space<vmem>>) attributes {dimension_semantics = [#tpu.dimension_semantics<parallel>], iteration_bounds = array<i64: 1>, scalar_prefetch = 0 : i64, scratch_operands = 0 : i64, tpu.core_type = #tpu.core_type<tc>, window_params = [{transform_indices = @transform_0, window_bounds = array<i64: 16, 32>}, {pipeline_mode = #tpu.pipeline_mode<synchronous>, transform_indices = @transform_1, window_bounds = array<i64: 32, 16>}, {transform_indices = @transform_2, window_bounds = array<i64: 16, 16>}]} {
    %c0 = arith.constant 0 : index
    %c0_0 = arith.constant 0 : index
    %0 = vector.load %arg1[%c0, %c0_0] : memref<16x32xf32, #tpu.memory_space<vmem>>, vector<16x32xf32>
    %c0_1 = arith.constant 0 : index
    %c0_2 = arith.constant 0 : index
    %1 = vector.load %arg2[%c0_1, %c0_2] : memref<32x16xf32, #tpu.memory_space<vmem>>, vector<32x16xf32>
    %cst = arith.constant dense<0.000000e+00> : vector<16x16xf32>
    %2 = tpu.matmul %0, %1, %cst {dimension_numbers = #tpu.dot_dimension_numbers<[1], [0], [0], [1], [0, 0, 1, 1], [], []>} : vector<16x32xf32>, vector<32x16xf32>, vector<16x16xf32> -> vector<16x16xf32>
    %c0_3 = arith.constant 0 : index
    %c0_4 = arith.constant 0 : index
    %3 = vector.load %arg3[%c0_3, %c0_4] : memref<16x16xf32, #tpu.memory_space<vmem>>, vector<16x16xf32>
    tpu.vector_store %arg3[%c0_3, %c0_4], %2 {strides = array<i32>} : memref<16x16xf32, #tpu.memory_space<vmem>>, vector<16x16xf32>,
    return
  }
  func.func @transform_0(%arg0: i32) -> (i32, i32) {
    %c0_i32 = arith.constant 0 : i32
    %c0_i32_0 = arith.constant 0 : i32
    return %arg0, %c0_i32 : i32, i32
  }
  func.func @transform_1(%arg0: i32) -> (i32, i32) {
    %c0_i32 = arith.constant 0 : i32
    %c0_i32_0 = arith.constant 0 : i32
    %c0_i32_1 = arith.constant 0 : i32
    return %c0_i32, %c0_i32_0 : i32, i32
  }
  func.func @transform_2(%arg0: i32) -> (i32, i32) {
    %c0_i32 = arith.constant 0 : i32
    %c0_i32_0 = arith.constant 0 : i32
    return %arg0, %c0_i32 : i32, i32
  }
}

</mosaic_0001>

<llo_original>
// kernel: _fwd.1
$region0: #{_fwd.1}
  #allocation0 [shape = 'u32[]', space=smem, size = 0x4, offset = 0x4, fixed_abs, tag = 'smem constant byte address 0x4 - core index']
  #allocation1 [shape = 'u32[144,128]{1,0:T(1,128)}', space=vmem, size = 0x12000, scoped, tag = 'internal scratch']
  %s0 = inlined_call_operand.vmem [shape: f32[16,32], index: 0, kind: input, shape index: {}]
  %s1 = inlined_call_operand.vmem [shape: f32[32,16], index: 1, kind: input, shape index: {}]
  %s2 = inlined_call_operand.hbm [shape: f32[16,16], index: 2, kind: output, shape index: {}]
  %s3 = sld [smem:[#allocation0]]
  $region18: #{_fwd.1} parent=0
    _
  %s5 = ssub.s32 1, %s3
  %s6 = scalar_select 0, %s5, %s3
  $region1: #{_fwd.1} parent=0
    #allocation2 [shape = 'u8[8192]{0}', space=vmem, size = 0x2000, scoped, tag = 'output window, operand 0, single buffered']
    #allocation3 [shape = 's32[1]{0}', space=sflag, size = 0x4, scoped, tag = 'scoped memory for _fwd.1']
    %7 = vsyncpa [#allocation3], 0
    // Predicated region
    $region2: #{_fwd.1} parent=1 // pred_check
      _
    $region3: #{_fwd.1} parent=1 // pred_check_branch
      %9 = sbr.rel (0) target = $region5
    $region4: #{_fwd.1} parent=1 // pred_region
      _
    $region5: #{_fwd.1} parent=1 // pred_fallthru
      _
    // Predicated region
    $region6: #{_fwd.1} parent=1 // pred_check
      _
    $region7: #{_fwd.1} parent=1 // pred_check_branch
      %11 = sbr.rel (0) target = $region9
    $region8: #{_fwd.1} parent=1 // pred_region
      _
    $region9: #{_fwd.1} parent=1 // pred_fallthru
      _
    %v12 = vld [vmem:[%s0] sm:$0xff]
    %v13 = vld [vmem:[%s0 + $0x8] sm:$0xff]
    %v14 = vld [vmem:[%s1] sm:$0xff]
    %v15 = vld [vmem:[%s1 + $0x8] sm:$0xff]
    %v16 = vld [vmem:[%s1 + $0x10] sm:$0xff]
    %v17 = vld [vmem:[%s1 + $0x18] sm:$0xff]
    %vm18 = vcmask 261120
    %v20 = vsel %vm18, %v12, 0
    %v23 = vsel %vm18, %v13, 0
    %25 = vmatprep.subr.mxu0 0.0
    %26 = vmatpush1.msra.mxu0 %v14
    %27 = vmatprep.subr.mxu0 0.0
    %28 = vmatpush1.msra.mxu0 %v15
    %29 = vmatprep.subr.mxu0 0.0
    %30 = vmatpush1.msra.mxu0 %v16
    %31 = vmatprep.subr.mxu0 0.0
    %32 = vmatpush1.msra.mxu0 %v17
    %33 = vmatprep.subr.mxu0 0.0
    %34 = vmatpush1.msra.mxu0 0.0
    %35 = vmatprep.subr.mxu0 0.0
    %36 = vmatpush1.msra.mxu0 0.0
    %37 = vmatprep.subr.mxu0 0.0
    %38 = vmatpush1.msra.mxu0 0.0
    %39 = vmatprep.subr.mxu0 0.0
    %40 = vmatpush1.msra.mxu0 0.0
    %41 = vmatprep.subr.mxu0 0.0
    %42 = vmatpush1.msra.mxu0 0.0
    %43 = vmatprep.subr.mxu0 0.0
    %44 = vmatpush1.msra.mxu0 0.0
    %45 = vmatprep.subr.mxu0 0.0
    %46 = vmatpush1.msra.mxu0 0.0
    %47 = vmatprep.subr.mxu0 0.0
    %48 = vmatpush1.msra.mxu0 0.0
    %49 = vmatprep.subr.mxu0 0.0
    %50 = vmatpush1.msra.mxu0 0.0
    %51 = vmatprep.subr.mxu0 0.0
    %52 = vmatpush1.msra.mxu0 0.0
    %53 = vmatprep.subr.mxu0 0.0
    %54 = vmatpush1.msra.mxu0 0.0
    %55 = vmatprep.subr.mxu0 0.0
    %56 = vmatpush1.msra.mxu0 0.0
    %57 = vmatprep.subr.mxu0 0.0
    %58 = vmatpush1.msra.mxu0 0.0
    %59 = vmatprep.subr.mxu0 0.0
    %60 = vmatpush1.msra.mxu0 0.0
    %61 = vmatprep.subr.mxu0 0.0
    %62 = vmatpush1.msra.mxu0 0.0
    %63 = vmatprep.subr.mxu0 0.0
    %64 = vmatpush1.msra.mxu0 0.0
    %65 = vmatprep.subr.mxu0 0.0
    %66 = vmatpush1.msra.mxu0 0.0
    %67 = vmatprep.subr.mxu0 0.0
    %68 = vmatpush1.msra.mxu0 0.0
    %69 = vmatprep.subr.mxu0 0.0
    %70 = vmatpush1.msra.mxu0 0.0
    %71 = vmatprep.subr.mxu0 0.0
    %72 = vmatpush1.msra.mxu0 0.0
    %73 = vmatprep.subr.mxu0 0.0
    %74 = vmatpush1.msra.mxu0 0.0
    %75 = vmatprep.subr.mxu0 0.0
    %76 = vmatpush1.msra.mxu0 0.0
    %77 = vmatprep.subr.mxu0 0.0
    %78 = vmatpush1.msra.mxu0 0.0
    %79 = vmatprep.subr.mxu0 0.0
    %80 = vmatpush1.msra.mxu0 0.0
    %81 = vmatprep.subr.mxu0 0.0
    %82 = vmatpush1.msra.mxu0 0.0
    %83 = vmatprep.subr.mxu0 0.0
    %84 = vmatpush1.msra.mxu0 0.0
    %85 = vmatprep.subr.mxu0 0.0
    %86 = vmatpush1.msra.mxu0 0.0
    %87 = vmatprep.subr.mxu0 0.0
    %88 = vmatpush1.msra.mxu0 0.0
    %89 = vmatprep.mubr.f32.mxu0 0.0
    %90 = vmatmul.mubr.f32.gmra.mrb[0].mxu0 %v20
    %v91 = vpop.f32.mrb[0].mxu0
    %v92 = vadd.f32 0.0, %v91
    %v93 = vpop.f32.mrb[0].mxu0
    %94 = vmatprep.mubr.f32.mxu0 0.0
    %95 = vmatmul.mubr.f32.gmra.mrb[0].mxu0 %v23
    %v96 = vpop.f32.mrb[0].mxu0
    %v97 = vadd.f32 0.0, %v96
    %v98 = vpop.f32.mrb[0].mxu0
    %99 = vdwg.mxu0
    %vm100 = vcmask 130048
    %101 = vst.msk [vmem:[#allocation2] sm:$0xff] %vm100, %v92
    %102 = vst.msk [vmem:[#allocation2 + $0x8] sm:$0xff] %vm100, %v97
    // Predicated region
    $region10: #{_fwd.1} parent=1 // pred_check
      _
    $region11: #{_fwd.1} parent=1 // pred_check_branch
      %104 = sbr.rel (0) target = $region13
    $region12: #{_fwd.1} parent=1 // pred_region
      %s106 = ssub.s32 256, 256
      %107 = vsyncadd [#allocation3], %s106
      %s108 = sshll.u32 [#allocation2], 4
      %s109 = int_to_ptr.vmem [resolvable:$true] %s108
      %114 = dma.vmem_to_hbm [thread:$0]  %s109, 256, %s2, [#allocation3], 128, 128, 8
    $region13: #{_fwd.1} parent=1 // pred_fallthru
      _
    // Predicated region
    $region14: #{_fwd.1} parent=1 // pred_check
      _
    $region15: #{_fwd.1} parent=1 // pred_check_branch
      %116 = sbr.rel (0) target = $region17
    $region16: #{_fwd.1} parent=1 // pred_region
      %117 = dma.done [#allocation3], 256
    $region17: #{_fwd.1} parent=1 // pred_fallthru
      _
    %118 = vsyncpa [#allocation3], 1

</llo_original>
